<compile_context>
chip_gen: v7x
topology: tpu7x:2x2x1
jax: 0.10.0
libtpu: 0.0.40
codegen_flags: <defaults>
</compile_context>

<pallas_src>
import math

import jax
import jax.numpy as jnp
import numpy as np
from jax import lax
from jax.experimental import pallas as pl
from jax.experimental.pallas import tpu as pltpu


# ----------------------------------------------------------------------------
# helpers
# ----------------------------------------------------------------------------
def _pick_tile(dim, target, align):
    """Largest tile <= target that is a multiple of `align` and divides `dim`.
    Falls back to the full dimension (always a legal block size)."""
    if dim <= target:
        return dim
    t = (target // align) * align
    while t >= align:
        if dim % t == 0:
            return t
        t -= align
    return dim


def _pick_head_group(num_heads, head_dim):
    """Smallest head-group size G (dividing num_heads) such that G*head_dim is a
    multiple of 128 lanes; otherwise all heads (block == full channel dim)."""
    for g in range(1, num_heads + 1):
        if num_heads % g == 0 and (g * head_dim) % 128 == 0:
            return g
    return num_heads


# ----------------------------------------------------------------------------
# Kernel 1: tiled linear layer  y = x @ W + b
#   x: (M, K), W: (K, N) [bf16], b: (1, N) [f32]  ->  y: (M, N)
# ----------------------------------------------------------------------------
def _linear_kernel(x_ref, w_ref, b_ref, o_ref, acc_ref):
    @pl.when(pl.program_id(2) == 0)
    def _init():
        acc_ref[...] = jnp.zeros_like(acc_ref)

    acc_ref[...] += jnp.dot(
        x_ref[...].astype(w_ref.dtype), w_ref[...],
        preferred_element_type=jnp.float32)

    @pl.when(pl.program_id(2) == pl.num_programs(2) - 1)
    def _finalize():
        o_ref[...] = (acc_ref[...] + b_ref[...].astype(jnp.float32)).astype(o_ref.dtype)


def pallas_linear(x2d, w, b, out_dtype, *, tm=256, tn=256, tk=512):
    """x2d: (M, K), w: (K, N), b: (N,) -> (M, N) of out_dtype."""
    M, K = x2d.shape
    Kw, N = w.shape
    assert K == Kw
    btm = _pick_tile(M, tm, 8)      # sublane-aligned
    btn = _pick_tile(N, tn, 128)    # lane-aligned
    btk = _pick_tile(K, tk, 128)    # lane-aligned (also multiple of 8)
    grid = (M // btm, N // btn, K // btk)

    bytes_accessed = (M * K * x2d.dtype.itemsize + K * N * w.dtype.itemsize
                      + N * 4 + M * N * np.dtype(out_dtype).itemsize)

    return pl.pallas_call(
        _linear_kernel,
        out_shape=jax.ShapeDtypeStruct((M, N), out_dtype),
        grid=grid,
        in_specs=[
            pl.BlockSpec((btm, btk), lambda i, j, kk: (i, kk)),
            pl.BlockSpec((btk, btn), lambda i, j, kk: (kk, j)),
            pl.BlockSpec((1, btn), lambda i, j, kk: (0, j)),
        ],
        out_specs=pl.BlockSpec((btm, btn), lambda i, j, kk: (i, j)),
        scratch_shapes=[pltpu.VMEM((btm, btn), jnp.float32)],
        compiler_params=pltpu.CompilerParams(
            dimension_semantics=("parallel", "parallel", "arbitrary"),
            vmem_limit_bytes=32 * 1024 * 1024,
        ),
        cost_estimate=pl.CostEstimate(
            flops=2 * M * N * K, transcendentals=0, bytes_accessed=bytes_accessed),
    )(x2d, w, b.reshape(1, N))


# ----------------------------------------------------------------------------
# Kernel 2: multi-head scaled-dot-product attention (flash / online softmax).
#   Heads are read directly from the (B, N, H*d) head-contiguous layout via
#   BlockSpec index maps; G heads per grid step; Nk tiled as the innermost
#   (arbitrary) reduction axis.  The 1/sqrt(d) scale is already folded into q.
# ----------------------------------------------------------------------------
def _make_sdpa_kernel(G, d):
    def kernel(q_ref, k_ref, v_ref, o_ref, m_sc, l_sc, acc_sc):
        kv_step = pl.program_id(3)

        @pl.when(kv_step == 0)
        def _init():
            m_sc[...] = jnp.full_like(m_sc, -jnp.inf)
            l_sc[...] = jnp.zeros_like(l_sc)
            acc_sc[...] = jnp.zeros_like(acc_sc)

        # G heads per step (statically unrolled); each head is a d-wide lane
        # slice of the lane-dense (tq, G*d) / (tkv, G*d) VMEM blocks.
        for g in range(G):
            lo, hi = g * d, (g + 1) * d
            q_g = q_ref[0, :, lo:hi]          # (tq, d)   bf16, scale pre-folded
            k_g = k_ref[0, :, lo:hi]          # (tkv, d)  bf16
            v_g = v_ref[0, :, lo:hi]          # (tkv, d)  bf16

            # scores: q_g @ k_g^T  (contract last dims), f32 accumulation.
            s = lax.dot_general(q_g, k_g, (((1,), (1,)), ((), ())),
                                preferred_element_type=jnp.float32)   # (tq, tkv)
            m_prev = m_sc[g]                                           # (tq, 1)
            m_new = jnp.maximum(m_prev, jnp.max(s, axis=-1, keepdims=True))
            alpha = jnp.exp(m_prev - m_new)
            p = jnp.exp(s - m_new)                                     # (tq, tkv)
            l_sc[g] = alpha * l_sc[g] + jnp.sum(p, axis=-1, keepdims=True)
            acc_sc[g] = alpha * acc_sc[g] + jnp.dot(
                p.astype(v_g.dtype), v_g, preferred_element_type=jnp.float32)
            m_sc[g] = m_new

        @pl.when(kv_step == pl.num_programs(3) - 1)
        def _finalize():
            for g in range(G):
                inv_l = pl.reciprocal(l_sc[g], approx=True)            # (tq, 1)
                o_ref[0, :, g * d:(g + 1) * d] = (acc_sc[g] * inv_l).astype(o_ref.dtype)

    return kernel


def pallas_sdpa(qp, kp, vp, *, num_heads, tq_target=256, tkv_target=512):
    """qp: (B, Nq, D), kp/vp: (B, Nk, D), D = num_heads * d, heads contiguous
    along the channel dim.  Returns (B, Nq, D) in the same layout."""
    B, Nq, D = qp.shape
    _, Nk, _ = kp.shape
    d = D // num_heads
    G = _pick_head_group(num_heads, d)
    gd = G * d
    tq = _pick_tile(Nq, tq_target, 8)
    tkv = _pick_tile(Nk, tkv_target, 8)
    grid = (B, num_heads // G, Nq // tq, Nk // tkv)

    return pl.pallas_call(
        _make_sdpa_kernel(G, d),
        out_shape=jax.ShapeDtypeStruct((B, Nq, D), qp.dtype),
        grid=grid,
        in_specs=[
            pl.BlockSpec((1, tq, gd), lambda b, hg, qi, kvi: (b, qi, hg)),
            pl.BlockSpec((1, tkv, gd), lambda b, hg, qi, kvi: (b, kvi, hg)),
            pl.BlockSpec((1, tkv, gd), lambda b, hg, qi, kvi: (b, kvi, hg)),
        ],
        out_specs=pl.BlockSpec((1, tq, gd), lambda b, hg, qi, kvi: (b, qi, hg)),
        scratch_shapes=[
            pltpu.VMEM((G, tq, 1), jnp.float32),   # running max
            pltpu.VMEM((G, tq, 1), jnp.float32),   # running denom
            pltpu.VMEM((G, tq, d), jnp.float32),   # running output accumulator
        ],
        compiler_params=pltpu.CompilerParams(
            dimension_semantics=("parallel", "parallel", "parallel", "arbitrary"),
            vmem_limit_bytes=32 * 1024 * 1024,
        ),
    )(qp, kp, vp)


# ----------------------------------------------------------------------------
# Module wrapper (parameters + forward glue)
# ----------------------------------------------------------------------------
class AttentionPallas:
    def __init__(self, embedding_dim, num_heads, downsample_rate=1, key=None,
                 compute_dtype=jnp.bfloat16):
        self.embedding_dim = embedding_dim
        self.internal_dim = embedding_dim // downsample_rate
        self.num_heads = num_heads
        assert self.internal_dim % num_heads == 0, "num_heads must divide embedding_dim."
        self.compute_dtype = compute_dtype

        if key is None:
            key = jax.random.PRNGKey(0)
        ks = jax.random.split(key, 8)

        def linear_params(kw, kb, fan_in, fan_out):
            bound = 1.0 / math.sqrt(fan_in)
            # stored as (in, out) for x @ W
            w = jax.random.uniform(kw, (fan_in, fan_out), jnp.float32, -bound, bound)
            b = jax.random.uniform(kb, (fan_out,), jnp.float32, -bound, bound)
            return w, b

        E, D = self.embedding_dim, self.internal_dim
        # f32 master parameters (used by the pure-JAX reference).
        self.wq, self.bq = linear_params(ks[0], ks[1], E, D)
        self.wk, self.bk = linear_params(ks[2], ks[3], E, D)
        self.wv, self.bv = linear_params(ks[4], ks[5], E, D)
        self.wo, self.bo = linear_params(ks[6], ks[7], D, E)

        # Kernel-side copies: 1/sqrt(d_head) folded into the q projection,
        # matmul operands in bf16 (accumulation stays f32 inside the kernels).
        d_head = D // num_heads
        scale = 1.0 / math.sqrt(d_head)
        cd = compute_dtype
        self.wq_k = (self.wq * scale).astype(cd)
        self.bq_k = self.bq * scale            # biases stay f32
        self.wk_k = self.wk.astype(cd)
        self.bk_k = self.bk
        self.wv_k = self.wv.astype(cd)
        self.bv_k = self.bv
        self.wo_k = self.wo.astype(cd)
        self.bo_k = self.bo

    def __call__(self, q, k, v):
        B, Nq, E = q.shape
        _, Nk, _ = k.shape
        D = self.internal_dim
        cd = self.compute_dtype

        # Projections (tiled Pallas matmuls). Outputs stay in the head-contiguous
        # (B, N, H*d) layout and in bf16 to halve downstream HBM traffic.
        # TODO(synk): the k/v projections could share one fused launch when k is v.
        qp = pallas_linear(q.reshape(B * Nq, E), self.wq_k, self.bq_k, cd).reshape(B, Nq, D)
        kp = pallas_linear(k.reshape(B * Nk, E), self.wk_k, self.bk_k, cd).reshape(B, Nk, D)
        vp = pallas_linear(v.reshape(B * Nk, E), self.wv_k, self.bv_k, cd).reshape(B, Nk, D)

        # Multi-head attention; head split/merge via BlockSpec index maps only.
        oh = pallas_sdpa(qp, kp, vp, num_heads=self.num_heads)        # (B, Nq, D)

        # Output projection back to f32 embeddings.
        out = pallas_linear(oh.reshape(B * Nq, D), self.wo_k, self.bo_k, jnp.float32)
        return out.reshape(B, Nq, E)


# ----------------------------------------------------------------------------
# Pure-JAX f32 reference (mirrors the PyTorch forward exactly).
# ----------------------------------------------------------------------------
def reference_forward(mod, q, k, v):
    B, Nq, E = q.shape
    _, Nk, _ = k.shape
    D = mod.internal_dim
    H = mod.num_heads
    d = D // H

    qp = q @ mod.wq + mod.bq
    kp = k @ mod.wk + mod.bk
    vp = v @ mod.wv + mod.bv

    qh = jnp.transpose(qp.reshape(B, Nq, H, d), (0, 2, 1, 3))
    kh = jnp.transpose(kp.reshape(B, Nk, H, d), (0, 2, 1, 3))
    vh = jnp.transpose(vp.reshape(B, Nk, H, d), (0, 2, 1, 3))

    attn = jnp.einsum("bhqd,bhkd->bhqk", qh, kh) / math.sqrt(d)
    attn = jax.nn.softmax(attn, axis=-1)
    oh = jnp.einsum("bhqk,bhkd->bhqd", attn, vh)
    o = jnp.transpose(oh, (0, 2, 1, 3)).reshape(B, Nq, D)
    return o @ mod.wo + mod.bo


if __name__ == "__main__":
    B, Nq, Nk = 2, 8, 16
    embedding_dim, num_heads, downsample_rate = 32, 2, 1

    key = jax.random.PRNGKey(0)
    kq, kk, kv_in, kparams = jax.random.split(key, 4)
    q = jax.random.normal(kq, (B, Nq, embedding_dim), jnp.float32)
    k = jax.random.normal(kk, (B, Nk, embedding_dim), jnp.float32)
    v = jax.random.normal(kv_in, (B, Nk, embedding_dim), jnp.float32)

    mod = AttentionPallas(embedding_dim, num_heads, downsample_rate, key=kparams)

    out = jax.block_until_ready(mod(q, k, v))
    ref = jax.block_until_ready(reference_forward(mod, q, k, v))

    assert out.shape == (B, Nq, embedding_dim)
    # Tolerance loosened vs. the pure-f32 version: matmul operands are bf16
    # (f32 accumulation), per the performance review.
    np.testing.assert_allclose(np.asarray(out), np.asarray(ref), rtol=5e-2, atol=5e-2)

    print("KERNEL_OK")
</pallas_src>

<mosaic_0001>
module attributes {stable_mosaic.version = 11 : i64} {
  func.func @_linear_kernel(%arg0: i32, %arg1: i32, %arg2: i32, %arg3: memref<16x32xf32, #tpu.memory_space<vmem>>, %arg4: memref<32x32xbf16, #tpu.memory_space<vmem>>, %arg5: memref<1x32xf32, #tpu.memory_space<vmem>>, %arg6: memref<16x32xbf16, #tpu.memory_space<vmem>>, %arg7: memref<16x32xf32, #tpu.memory_space<vmem>>) attributes {dimension_semantics = [#tpu.dimension_semantics<parallel>, #tpu.dimension_semantics<parallel>, #tpu.dimension_semantics<arbitrary>], iteration_bounds = array<i64: 1, 1, 1>, scalar_prefetch = 0 : i64, scratch_operands = 1 : i64, tpu.core_type = #tpu.core_type<tc>, window_params = [{transform_indices = @transform_0, window_bounds = array<i64: 16, 32>}, {transform_indices = @transform_1, window_bounds = array<i64: 32, 32>}, {transform_indices = @transform_2, window_bounds = array<i64: 1, 32>}, {transform_indices = @transform_3, window_bounds = array<i64: 16, 32>}]} {
    %c0_i32 = arith.constant 0 : i32
    %0 = arith.cmpi eq, %arg2, %c0_i32 : i32
    %1 = arith.extui %0 : i1 to i32
    %c0_i32_0 = arith.constant 0 : i32
    %2 = arith.cmpi ne, %1, %c0_i32_0 : i32
    scf.if %2 {
      %cst_10 = arith.constant 0.000000e+00 : f32
      %13 = vector.broadcast %cst_10 : f32 to vector<16x32xf32>
      %c0_11 = arith.constant 0 : index
      %c0_12 = arith.constant 0 : index
      %14 = vector.load %arg7[%c0_11, %c0_12] : memref<16x32xf32, #tpu.memory_space<vmem>>, vector<16x32xf32>
      tpu.vector_store %arg7[%c0_11, %c0_12], %13 {strides = array<i32>} : memref<16x32xf32, #tpu.memory_space<vmem>>, vector<16x32xf32>,
    } else {
    }
    %c0 = arith.constant 0 : index
    %c0_1 = arith.constant 0 : index
    %3 = vector.load %arg7[%c0, %c0_1] : memref<16x32xf32, #tpu.memory_space<vmem>>, vector<16x32xf32>
    %c0_2 = arith.constant 0 : index
    %c0_3 = arith.constant 0 : index
    %4 = vector.load %arg3[%c0_2, %c0_3] : memref<16x32xf32, #tpu.memory_space<vmem>>, vector<16x32xf32>
    %5 = arith.truncf %4 : vector<16x32xf32> to vector<16x32xbf16>
    %c0_4 = arith.constant 0 : index
    %c0_5 = arith.constant 0 : index
    %6 = vector.load %arg4[%c0_4, %c0_5] : memref<32x32xbf16, #tpu.memory_space<vmem>>, vector<32x32xbf16>
    %cst = arith.constant dense<0.000000e+00> : vector<16x32xf32>
    %7 = tpu.matmul %5, %6, %cst {dimension_numbers = #tpu.dot_dimension_numbers<[1], [0], [0], [1], [0, 0, 1, 1], [], []>} : vector<16x32xbf16>, vector<32x32xbf16>, vector<16x32xf32> -> vector<16x32xf32>
    %8 = arith.addf %3, %7 : vector<16x32xf32>
    %c0_6 = arith.constant 0 : index
    %c0_7 = arith.constant 0 : index
    %9 = vector.load %arg7[%c0_6, %c0_7] : memref<16x32xf32, #tpu.memory_space<vmem>>, vector<16x32xf32>
    tpu.vector_store %arg7[%c0_6, %c0_7], %8 {strides = array<i32>} : memref<16x32xf32, #tpu.memory_space<vmem>>, vector<16x32xf32>,
    %c0_i32_8 = arith.constant 0 : i32
    %10 = arith.cmpi eq, %arg2, %c0_i32_8 : i32
    %11 = arith.extui %10 : i1 to i32
    %c0_i32_9 = arith.constant 0 : i32
    %12 = arith.cmpi ne, %11, %c0_i32_9 : i32
    scf.if %12 {
      %c0_10 = arith.constant 0 : index
      %c0_11 = arith.constant 0 : index
      %13 = vector.load %arg7[%c0_10, %c0_11] : memref<16x32xf32, #tpu.memory_space<vmem>>, vector<16x32xf32>
      %c0_12 = arith.constant 0 : index
      %c0_13 = arith.constant 0 : index
      %14 = vector.load %arg5[%c0_12, %c0_13] : memref<1x32xf32, #tpu.memory_space<vmem>>, vector<1x32xf32>
      %15 = vector.broadcast %14 : vector<1x32xf32> to vector<16x32xf32>
      %16 = arith.addf %13, %15 : vector<16x32xf32>
      %17 = arith.truncf %16 : vector<16x32xf32> to vector<16x32xbf16>
      %c0_14 = arith.constant 0 : index
      %c0_15 = arith.constant 0 : index
      %18 = vector.load %arg6[%c0_14, %c0_15] : memref<16x32xbf16, #tpu.memory_space<vmem>>, vector<16x32xbf16>
      tpu.vector_store %arg6[%c0_14, %c0_15], %17 {strides = array<i32>} : memref<16x32xbf16, #tpu.memory_space<vmem>>, vector<16x32xbf16>,
    } else {
    }
    return
  }
  func.func @transform_0(%arg0: i32, %arg1: i32, %arg2: i32) -> (i32, i32) {
    %c0_i32 = arith.constant 0 : i32
    return %arg0, %arg2 : i32, i32
  }
  func.func @transform_1(%arg0: i32, %arg1: i32, %arg2: i32) -> (i32, i32) {
    %c0_i32 = arith.constant 0 : i32
    return %arg2, %arg1 : i32, i32
  }
  func.func @transform_2(%arg0: i32, %arg1: i32, %arg2: i32) -> (i32, i32) {
    %c0_i32 = arith.constant 0 : i32
    %c0_i32_0 = arith.constant 0 : i32
    return %c0_i32, %arg1 : i32, i32
  }
  func.func @transform_3(%arg0: i32, %arg1: i32, %arg2: i32) -> (i32, i32) {
    %c0_i32 = arith.constant 0 : i32
    return %arg0, %arg1 : i32, i32
  }
}

</mosaic_0001>

<llo_original>
// kernel: tpu_custom_call.1
$region0: #{tpu_custom_call.1}
  #allocation0 [shape = 'u32[]', space=smem, size = 0x4, offset = 0x4, fixed_abs, tag = 'smem constant byte address 0x4 - core index']
  #allocation1 [shape = 'u32[144,128]{1,0:T(1,128)}', space=vmem, size = 0x12000, scoped, tag = 'internal scratch']
  #allocation2 [shape = 'f32[16,32]{1,0:T(8,128)}', space=vmem, size = 0x2000, scoped, tag = 'scratch operand']
  %s0 = inlined_call_operand.hbm [shape: f32[16,32], index: 0, kind: input, shape index: {}]
  %s1 = inlined_call_operand.hbm [shape: bf16[32,32], index: 1, kind: input, shape index: {}]
  %s2 = inlined_call_operand.vmem [shape: f32[1,32], index: 2, kind: input, shape index: {}]
  %s3 = inlined_call_operand.hbm [shape: bf16[16,32], index: 3, kind: output, shape index: {}]
  %s4 = sld [smem:[#allocation0]]
  $region38: #{tpu_custom_call.1} parent=0
    _
  %s6 = ssub.s32 1, %s4
  %s7 = scalar_select 0, %s6, %s4
  $region1: #{tpu_custom_call.1} parent=0
    #allocation3 [shape = 'u8[8192]{0}', space=vmem, size = 0x2000, scoped, tag = 'input window, operand 0, single buffered']
    #allocation4 [shape = 's32[1]{0}', space=sflag, size = 0x4, scoped, tag = 'scoped memory for tpu_custom_call.1']
    #allocation5 [shape = 's32[1]{0}', space=sflag, size = 0x4, scoped, tag = 'scoped memory for tpu_custom_call.1']
    #allocation6 [shape = 'u8[8192]{0}', space=vmem, size = 0x2000, scoped, tag = 'input window, operand 1, single buffered']
    #allocation7 [shape = 's32[1]{0}', space=sflag, size = 0x4, scoped, tag = 'scoped memory for tpu_custom_call.1']
    #allocation8 [shape = 'u8[4096]{0}', space=vmem, size = 0x1000, scoped, tag = 'output window, operand 0, single buffered']
    %8 = vsyncpa [#allocation4], 0
    %9 = vsyncpa [#allocation7], 0
    %10 = vsyncpa [#allocation5], 0
    // Predicated region
    $region2: #{tpu_custom_call.1} parent=1 // pred_check
      _
    $region3: #{tpu_custom_call.1} parent=1 // pred_check_branch
      %12 = sbr.rel (0) target = $region5
    $region4: #{tpu_custom_call.1} parent=1 // pred_region
      %s14 = ssub.s32 256, 256
      %15 = vsyncadd [#allocation4], %s14
      %s16 = sshll.u32 [#allocation3], 4
      %s17 = int_to_ptr.vmem [resolvable:$true] %s16
      %22 = dma.hbm_to_vmem [thread:$0]  %s0, 256, %s17, [#allocation4], 128, 128, 8
    $region5: #{tpu_custom_call.1} parent=1 // pred_fallthru
      _
    // Predicated region
    $region6: #{tpu_custom_call.1} parent=1 // pred_check
      _
    $region7: #{tpu_custom_call.1} parent=1 // pred_check_branch
      %24 = sbr.rel (0) target = $region9
    $region8: #{tpu_custom_call.1} parent=1 // pred_region
      %s26 = ssub.s32 256, 256
      %27 = vsyncadd [#allocation7], %s26
      %s28 = sshll.u32 [#allocation6], 4
      %s29 = int_to_ptr.vmem [resolvable:$true] %s28
      %34 = dma.hbm_to_vmem [thread:$0]  %s1, 256, %s29, [#allocation7], 64, 64, 4
    $region9: #{tpu_custom_call.1} parent=1 // pred_fallthru
      _
    // Predicated region
    $region10: #{tpu_custom_call.1} parent=1 // pred_check
      _
    $region11: #{tpu_custom_call.1} parent=1 // pred_check_branch
      %36 = sbr.rel (0) target = $region13
    $region12: #{tpu_custom_call.1} parent=1 // pred_region
      _
    $region13: #{tpu_custom_call.1} parent=1 // pred_fallthru
      _
    // Predicated region
    $region14: #{tpu_custom_call.1} parent=1 // pred_check
      _
    $region15: #{tpu_custom_call.1} parent=1 // pred_check_branch
      %38 = sbr.rel (0) target = $region17
    $region16: #{tpu_custom_call.1} parent=1 // pred_region
      %39 = dma.done [#allocation4], 256
    $region17: #{tpu_custom_call.1} parent=1 // pred_fallthru
      _
    // Predicated region
    $region18: #{tpu_custom_call.1} parent=1 // pred_check
      _
    $region19: #{tpu_custom_call.1} parent=1 // pred_check_branch
      %41 = sbr.rel (0) target = $region21
    $region20: #{tpu_custom_call.1} parent=1 // pred_region
      %42 = dma.done [#allocation7], 256
    $region21: #{tpu_custom_call.1} parent=1 // pred_fallthru
      _
    %p44 = scmp.eq.s32.totalorder 0, 0
    // Predicated region
    $region22: #{tpu_custom_call.1} parent=1 // pred_check
      %p45 = pneg %p44
    $region23: #{tpu_custom_call.1} parent=1 // pred_check_branch
      %47 = sbr.rel (%p45) target = $region25
    $region24: #{tpu_custom_call.1} parent=1 // pred_region
      %vm48 = vcmask 261120
      %49 = vst.msk [vmem:[#allocation2] sm:$0xff] %vm48, 0.0
      %50 = vst.msk [vmem:[#allocation2 + $0x8] sm:$0xff] %vm48, 0.0
    $region25: #{tpu_custom_call.1} parent=1 // pred_fallthru
      _
    %v51 = vld [vmem:[#allocation2] sm:$0xff]
    %v52 = vld [vmem:[#allocation2 + $0x8] sm:$0xff]
    %v53 = vld [vmem:[#allocation3] sm:$0xff]
    %v54 = vld [vmem:[#allocation3 + $0x8] sm:$0xff]
    %v55 = vpack.c.bf16 %v54, %v53
    %v56 = vld [vmem:[#allocation6] sm:$0xf]
    %v57 = vld [vmem:[#allocation6 + $0x4] sm:$0xf]
    %v58 = vld [vmem:[#allocation6 + $0x8] sm:$0xf]
    %v59 = vld [vmem:[#allocation6 + $0xc] sm:$0xf]
    %v64 = vunpack.c.l.b16 %v56
    %v65 = vunpack.c.l.b16 %v57
    %v66 = vunpack.c.l.b16 %v58
    %v67 = vunpack.c.l.b16 %v59
    %v68 = vpack.c.b16 %v65, %v64
    %v69 = vpack.c.b16 %v67, %v66
    %vm72 = vcmask 261120
    %v74 = vsel %vm72, %v55, 0
    %76 = vmatprep.subr.bf16.mxu0 0
    %77 = vmatpush1.bf16.msra.mxu0 %v68
    %78 = vmatprep.subr.bf16.mxu0 0
    %79 = vmatpush1.bf16.msra.mxu0 %v69
    %80 = vmatprep.subr.bf16.mxu0 0
    %81 = vmatpush1.bf16.msra.mxu0 0
    %82 = vmatprep.subr.bf16.mxu0 0
    %83 = vmatpush1.bf16.msra.mxu0 0
    %84 = vmatprep.subr.bf16.mxu0 0
    %85 = vmatpush1.bf16.msra.mxu0 0
    %86 = vmatprep.subr.bf16.mxu0 0
    %87 = vmatpush1.bf16.msra.mxu0 0
    %88 = vmatprep.subr.bf16.mxu0 0
    %89 = vmatpush1.bf16.msra.mxu0 0
    %90 = vmatprep.subr.bf16.mxu0 0
    %91 = vmatpush1.bf16.msra.mxu0 0
    %92 = vmatprep.subr.bf16.mxu0 0
    %93 = vmatpush1.bf16.msra.mxu0 0
    %94 = vmatprep.subr.bf16.mxu0 0
    %95 = vmatpush1.bf16.msra.mxu0 0
    %96 = vmatprep.subr.bf16.mxu0 0
    %97 = vmatpush1.bf16.msra.mxu0 0
    %98 = vmatprep.subr.bf16.mxu0 0
    %99 = vmatpush1.bf16.msra.mxu0 0
    %100 = vmatprep.subr.bf16.mxu0 0
    %101 = vmatpush1.bf16.msra.mxu0 0
    %102 = vmatprep.subr.bf16.mxu0 0
    %103 = vmatpush1.bf16.msra.mxu0 0
    %104 = vmatprep.subr.bf16.mxu0 0
    %105 = vmatpush1.bf16.msra.mxu0 0
    %106 = vmatprep.subr.bf16.mxu0 0
    %107 = vmatpush1.bf16.msra.mxu0 0
    %108 = vmatprep.mubr.bf16.mxu0 0
    %109 = vmatmul.mubr.bf16.gmra.mrb[0].mxu0 %v74
    %v110 = vpop.f32.mrb[0].mxu0
    %v111 = vadd.f32 0.0, %v110
    %v112 = vpop.f32.mrb[0].mxu0
    %v113 = vpop.f32.mrb[0].mxu0
    %v114 = vadd.f32 0.0, %v113
    %v115 = vpop.f32.mrb[0].mxu0
    %116 = vdwg.mxu0
    %v117 = vadd.f32 %v51, %v111
    %v118 = vadd.f32 %v52, %v114
    %119 = vst.msk [vmem:[#allocation2] sm:$0xff] %vm72, %v117
    %120 = vst.msk [vmem:[#allocation2 + $0x8] sm:$0xff] %vm72, %v118
    // Predicated region
    $region26: #{tpu_custom_call.1} parent=1 // pred_check
      %p121 = pneg %p44
    $region27: #{tpu_custom_call.1} parent=1 // pred_check_branch
      %123 = sbr.rel (%p121) target = $region29
    $region28: #{tpu_custom_call.1} parent=1 // pred_region
      %v124 = vld [vmem:[#allocation2] sm:$0xff]
      %v125 = vld [vmem:[#allocation2 + $0x8] sm:$0xff]
      %v126 = vld [vmem:[%s2] sm:$0x1]
      %v128 = vlaneseq
      %v129 = vshrl.u32 %v128, 7
      %v130 = vsub.s32 0, %v129
      %v131 = vrot.slane %v126, %v130
      %v133 = vadd.f32 %v124, %v131
      %v134 = vadd.f32 %v125, %v131
      %v135 = vpack.c.bf16 %v134, %v133
      %v137 = vunpack.c.l.b16 %v135
      %v138 = vunpack.c.h.b16 %v135
      %v139 = vpack.c.b16 %v137, %v137
      %v140 = vpack.c.b16 %v138, %v138
      %vm143 = vcmask 257024
      %144 = vst.msk [vmem:[#allocation8] sm:$0xf] %vm143, %v139
      %145 = vst.msk [vmem:[#allocation8 + $0x4] sm:$0xf] %vm143, %v140
    $region29: #{tpu_custom_call.1} parent=1 // pred_fallthru
      _
    // Predicated region
    $region30: #{tpu_custom_call.1} parent=1 // pred_check
      _
    $region31: #{tpu_custom_call.1} parent=1 // pred_check_branch
      %147 = sbr.rel (0) target = $region33
    $region32: #{tpu_custom_call.1} parent=1 // pred_region
      %s149 = ssub.s32 128, 128
      %150 = vsyncadd [#allocation5], %s149
      %s151 = sshll.u32 [#allocation8], 4
      %s152 = int_to_ptr.vmem [resolvable:$true] %s151
      %157 = dma.vmem_to_hbm [thread:$0]  %s152, 128, %s3, [#allocation5], 64, 64, 4
    $region33: #{tpu_custom_call.1} parent=1 // pred_fallthru
      _
    // Predicated region
    $region34: #{tpu_custom_call.1} parent=1 // pred_check
      _
    $region35: #{tpu_custom_call.1} parent=1 // pred_check_branch
      %159 = sbr.rel (0) target = $region37
    $region36: #{tpu_custom_call.1} parent=1 // pred_region
      %160 = dma.done [#allocation5], 128
    $region37: #{tpu_custom_call.1} parent=1 // pred_fallthru
      _
    %161 = vsyncpa [#allocation4], 1
    %162 = vsyncpa [#allocation7], 1
    %163 = vsyncpa [#allocation5], 1

</llo_original>
